<compile_context>
chip_gen: v7x
topology: tpu7x:2x2x1
jax: 0.10.0
libtpu: 0.0.40
codegen_flags: <defaults>
</compile_context>

<pallas_src>
import jax
import jax.numpy as jnp
from jax.experimental import pallas as pl
from jax.experimental.pallas import tpu as pltpu

NUM_LAYERS = 6  # linear1 (3 layers) + linear3 + linear4 + linear5


# ---------------------------------------------------------------------------
# Kernels
# ---------------------------------------------------------------------------
def _encoder_fused_kernel(x_ref, w_ref, b_ref, o_ref):
    """All L weights resident in VMEM; the 6 layers are unrolled in one step.

    x_ref: (TB, H)       input batch tile
    w_ref: (L, H, H)     all weights, laid out [in, out] (fetched once)
    b_ref: (L, 1, H)     all biases (f32)
    o_ref: (TB, H)       output tile
    """
    L = w_ref.shape[0]
    h = x_ref[...].astype(jnp.float32)
    for l in range(L):  # static unroll: 6 back-to-back MXU matmuls
        lhs = h.astype(w_ref.dtype)  # bf16 LHS when weights are bf16 (no-op for f32)
        h = jnp.dot(lhs, w_ref[l], preferred_element_type=jnp.float32) + b_ref[l]
    o_ref[...] = h.astype(o_ref.dtype)


def _encoder_stream_kernel(x_ref, w_ref, b_ref, o_ref):
    """One grid step = one layer on one batch tile; activation lives in o_ref.

    x_ref: (TB, H)       input batch tile (resident across the layer axis)
    w_ref: (1, H, H)     this layer's weight [in, out] (streamed + double-buffered)
    b_ref: (1, 1, H)     this layer's bias (f32)
    o_ref: (TB, H)       output tile, doubles as the running activation
                         (resident across the layer axis; f32 output dtype).
    """
    l = pl.program_id(1)
    w = w_ref[0]   # (H, H)
    b = b_ref[0]   # (1, H) -> broadcasts over batch rows

    @pl.when(l == 0)
    def _():
        lhs = x_ref[...].astype(w_ref.dtype)
        o_ref[...] = (jnp.dot(lhs, w, preferred_element_type=jnp.float32)
                      + b).astype(o_ref.dtype)

    @pl.when(l != 0)
    def _():
        lhs = o_ref[...].astype(w_ref.dtype)
        o_ref[...] = (jnp.dot(lhs, w, preferred_element_type=jnp.float32)
                      + b).astype(o_ref.dtype)


# ---------------------------------------------------------------------------
# Wrapper
# ---------------------------------------------------------------------------
def _vmem_capacity_bytes():
    """Generation-aware VMEM capacity (128 MiB v5e/v6e, 64 MiB/TC v7x)."""
    try:
        info = pltpu.get_tpu_info()
        cap = getattr(info, "vmem_capacity_bytes", None)
        if cap:
            return int(cap)
    except Exception:
        pass
    return 64 * 1024 * 1024  # conservative fallback (v7x per-core figure)


def encoder_forward(x, weights_t, biases, *, weight_dtype=None,
                    batch_tile=None, force_stream=False):
    """x: (B, H) f32; weights_t: (L, H, H) [in, out]; biases: (L, 1, H) f32.

    weight_dtype: optionally stream weights at lower precision (e.g. bf16);
                  accumulation stays f32 on the MXU.
    """
    B, H = x.shape
    L = weights_t.shape[0]
    if weight_dtype is not None and weights_t.dtype != jnp.dtype(weight_dtype):
        weights_t = weights_t.astype(weight_dtype)
    wbytes = jnp.dtype(weights_t.dtype).itemsize

    vmem_budget = int(0.75 * _vmem_capacity_bytes())

    # Batch tiling: MXU-M-sized multiples for large B; batch axis is "parallel"
    # so v7x's two TensorCores split the batch tiles when num_bt >= 2.
    if batch_tile is None:
        batch_tile = B
        if B > 256:
            for cand in (512, 256, 128):
                if B % cand == 0:
                    batch_tile = cand
                    break
    assert B % batch_tile == 0, "batch must divide evenly into batch tiles"
    num_bt = B // batch_tile

    resident_w_bytes = L * H * H * wbytes + L * H * 4        # full weight+bias slab
    act_tile_bytes = 4 * batch_tile * H * 4                  # x + out tiles, 2x buffered (f32)
    use_fused = (not force_stream) and (
        2 * (resident_w_bytes + act_tile_bytes) <= vmem_budget)

    if use_fused:
        # All weights resident (constant block index => fetched once, never
        # re-streamed per batch tile); 6 layers unrolled in one grid step.
        grid_spec = pltpu.PrefetchScalarGridSpec(
            num_scalar_prefetch=0,
            grid=(num_bt,),
            in_specs=[
                pl.BlockSpec((batch_tile, H), lambda i: (i, 0)),
                pl.BlockSpec((L, H, H), lambda i: (0, 0, 0)),
                pl.BlockSpec((L, 1, H), lambda i: (0, 0, 0)),
            ],
            out_specs=pl.BlockSpec((batch_tile, H), lambda i: (i, 0)),
        )
        kernel = _encoder_fused_kernel
        dims = ("parallel",)
        need = resident_w_bytes + act_tile_bytes + batch_tile * H * 4
        bytes_accessed = resident_w_bytes + 2 * B * H * 4
    else:
        # Layer-streamed: weight/bias indexed by the layer grid axis and
        # auto-double-buffered; activation accumulates directly in o_ref.
        grid_spec = pltpu.PrefetchScalarGridSpec(
            num_scalar_prefetch=0,
            grid=(num_bt, L),  # layer axis innermost ("arbitrary")
            in_specs=[
                pl.BlockSpec((batch_tile, H), lambda i, l: (i, 0)),
                pl.BlockSpec((1, H, H), lambda i, l: (l, 0, 0)),
                pl.BlockSpec((1, 1, H), lambda i, l: (l, 0, 0)),
            ],
            out_specs=pl.BlockSpec((batch_tile, H), lambda i, l: (i, 0)),
        )
        kernel = _encoder_stream_kernel
        dims = ("parallel", "arbitrary")
        need = (2 * H * H * wbytes + 2 * H * 4   # streamed weight + bias (double-buffered)
                + 4 * batch_tile * H * 4         # x tile + out tile
                + batch_tile * H * 4)            # matmul temporaries
        # Weights are re-read once per batch tile in this layout.
        bytes_accessed = num_bt * (L * H * H * wbytes + L * H * 4) + 2 * B * H * 4

    vmem_limit = int(min(vmem_budget, max(2 * need, 16 * 1024 * 1024)))

    return pl.pallas_call(
        kernel,
        out_shape=jax.ShapeDtypeStruct((B, H), x.dtype),
        grid_spec=grid_spec,
        compiler_params=pltpu.CompilerParams(
            dimension_semantics=dims,
            vmem_limit_bytes=vmem_limit,
        ),
        cost_estimate=pl.CostEstimate(
            flops=2 * L * B * H * H,
            transcendentals=0,
            bytes_accessed=int(bytes_accessed),
        ),
    )(x, weights_t, biases)


# ---------------------------------------------------------------------------
# Parameter init (torch.nn.Linear-style) and references
# ---------------------------------------------------------------------------
def init_params(key, hidden_dim):
    """uniform(-1/sqrt(in), 1/sqrt(in)) like torch.nn.Linear defaults."""
    bound = 1.0 / (hidden_dim ** 0.5)
    keys = jax.random.split(key, 2 * NUM_LAYERS)
    ws, bs = [], []
    for i in range(NUM_LAYERS):
        w = jax.random.uniform(keys[2 * i], (hidden_dim, hidden_dim),
                               jnp.float32, -bound, bound)   # torch layout: (out, in)
        b = jax.random.uniform(keys[2 * i + 1], (hidden_dim,),
                               jnp.float32, -bound, bound)
        ws.append(w)
        bs.append(b)
    W = jnp.stack(ws)                     # (L, out, in)
    Bv = jnp.stack(bs)                    # (L, out)
    W_t = jnp.transpose(W, (0, 2, 1))     # (L, in, out) -> no in-kernel transposes
    B_k = Bv[:, None, :]                  # (L, 1, out)
    return W, Bv, W_t, B_k


def reference_forward(x, W, Bv):
    h = x
    for i in range(NUM_LAYERS):
        h = h @ W[i].T + Bv[i]
    return h


def reference_forward_castweights(x, W_t, B_k, cast_dtype):
    """Same-precision reference for reduced-precision weight streaming."""
    h = x.astype(jnp.float32)
    for i in range(NUM_LAYERS):
        h = jnp.dot(h.astype(cast_dtype), W_t[i].astype(cast_dtype),
                    preferred_element_type=jnp.float32) + B_k[i]
    return h


if __name__ == "__main__":
    # Demo shape: lane-dense hidden (multiple of 128) so the MXU tile is not
    # lane-padded and output stores are unmasked.
    batch, hidden_dim = 8, 128

    key = jax.random.PRNGKey(0)
    kx, kp = jax.random.split(key)
    x = jax.random.normal(kx, (batch, hidden_dim), dtype=jnp.float32)
    W, Bv, W_t, B_k = init_params(kp, hidden_dim)
    ref = reference_forward(x, W, Bv)

    # 1) Fused path (all 6 weights resident, layers unrolled), f32 weights.
    out = jax.block_until_ready(encoder_forward(x, W_t, B_k))
    assert out.shape == (batch, hidden_dim)
    assert jnp.allclose(out, ref, rtol=3e-5, atol=3e-5), "fused f32 mismatch"

    # 2) Fused path with bf16-streamed weights (f32 MXU accumulation),
    #    validated against a same-precision JAX reference.
    out_bf16 = jax.block_until_ready(
        encoder_forward(x, W_t, B_k, weight_dtype=jnp.bfloat16))
    ref_bf16 = reference_forward_castweights(x, W_t, B_k, jnp.bfloat16)
    assert jnp.allclose(out_bf16, ref_bf16, rtol=1e-2, atol=1e-2), "bf16 mismatch"

    # 3) Layer-streamed path (used when H is too large for resident weights),
    #    exercised explicitly with multiple batch tiles to validate the
    #    o_ref-accumulator across batch-tile boundaries.
    b2, h2 = 64, 256
    kx2, kp2 = jax.random.split(jax.random.PRNGKey(1))
    x2 = jax.random.normal(kx2, (b2, h2), dtype=jnp.float32)
    W2, Bv2, W2_t, B2_k = init_params(kp2, h2)
    out2 = jax.block_until_ready(
        encoder_forward(x2, W2_t, B2_k, batch_tile=32, force_stream=True))
    ref2 = reference_forward(x2, W2, Bv2)
    assert out2.shape == (b2, h2)
    assert jnp.allclose(out2, ref2, rtol=1e-4, atol=1e-4), "streamed f32 mismatch"

    print("KERNEL_OK")
</pallas_src>

<mosaic_0001>
module attributes {stable_mosaic.version = 11 : i64} {
  func.func @_encoder_fused_kernel(%arg0: i32, %arg1: memref<8x128xf32, #tpu.memory_space<vmem>>, %arg2: memref<6x128x128xf32, #tpu.memory_space<vmem>>, %arg3: memref<6x1x128xf32, #tpu.memory_space<vmem>>, %arg4: memref<8x128xf32, #tpu.memory_space<vmem>>) attributes {dimension_semantics = [#tpu.dimension_semantics<parallel>], iteration_bounds = array<i64: 1>, scalar_prefetch = 0 : i64, scratch_operands = 0 : i64, tpu.core_type = #tpu.core_type<tc>, window_params = [{transform_indices = @transform_0, window_bounds = array<i64: 8, 128>}, {pipeline_mode = #tpu.pipeline_mode<synchronous>, transform_indices = @transform_1, window_bounds = array<i64: 6, 128, 128>}, {pipeline_mode = #tpu.pipeline_mode<synchronous>, transform_indices = @transform_2, window_bounds = array<i64: 6, 1, 128>}, {transform_indices = @transform_3, window_bounds = array<i64: 8, 128>}]} {
    %c0 = arith.constant 0 : index
    %c0_0 = arith.constant 0 : index
    %0 = vector.load %arg1[%c0, %c0_0] : memref<8x128xf32, #tpu.memory_space<vmem>>, vector<8x128xf32>
    %c0_1 = arith.constant 0 : index
    %c0_2 = arith.constant 0 : index
    %c0_3 = arith.constant 0 : index
    %1 = vector.load %arg2[%c0_1, %c0_2, %c0_3] : memref<6x128x128xf32, #tpu.memory_space<vmem>>, vector<1x128x128xf32>
    %2 = vector.shape_cast %1 : vector<1x128x128xf32> to vector<128x128xf32>
    %cst = arith.constant dense<0.000000e+00> : vector<8x128xf32>
    %3 = tpu.matmul %0, %2, %cst {dimension_numbers = #tpu.dot_dimension_numbers<[1], [0], [0], [1], [0, 0, 1, 1], [], []>} : vector<8x128xf32>, vector<128x128xf32>, vector<8x128xf32> -> vector<8x128xf32>
    %c0_4 = arith.constant 0 : index
    %c0_5 = arith.constant 0 : index
    %c0_6 = arith.constant 0 : index
    %4 = vector.load %arg3[%c0_4, %c0_5, %c0_6] : memref<6x1x128xf32, #tpu.memory_space<vmem>>, vector<1x1x128xf32>
    %5 = vector.shape_cast %4 : vector<1x1x128xf32> to vector<1x128xf32>
    %6 = vector.broadcast %5 : vector<1x128xf32> to vector<8x128xf32>
    %7 = arith.addf %3, %6 : vector<8x128xf32>
    %c1 = arith.constant 1 : index
    %c0_7 = arith.constant 0 : index
    %c0_8 = arith.constant 0 : index
    %8 = vector.load %arg2[%c1, %c0_7, %c0_8] : memref<6x128x128xf32, #tpu.memory_space<vmem>>, vector<1x128x128xf32>
    %9 = vector.shape_cast %8 : vector<1x128x128xf32> to vector<128x128xf32>
    %cst_9 = arith.constant dense<0.000000e+00> : vector<8x128xf32>
    %10 = tpu.matmul %7, %9, %cst_9 {dimension_numbers = #tpu.dot_dimension_numbers<[1], [0], [0], [1], [0, 0, 1, 1], [], []>} : vector<8x128xf32>, vector<128x128xf32>, vector<8x128xf32> -> vector<8x128xf32>
    %c1_10 = arith.constant 1 : index
    %c0_11 = arith.constant 0 : index
    %c0_12 = arith.constant 0 : index
    %11 = vector.load %arg3[%c1_10, %c0_11, %c0_12] : memref<6x1x128xf32, #tpu.memory_space<vmem>>, vector<1x1x128xf32>
    %12 = vector.shape_cast %11 : vector<1x1x128xf32> to vector<1x128xf32>
    %13 = vector.broadcast %12 : vector<1x128xf32> to vector<8x128xf32>
    %14 = arith.addf %10, %13 : vector<8x128xf32>
    %c2 = arith.constant 2 : index
    %c0_13 = arith.constant 0 : index
    %c0_14 = arith.constant 0 : index
    %15 = vector.load %arg2[%c2, %c0_13, %c0_14] : memref<6x128x128xf32, #tpu.memory_space<vmem>>, vector<1x128x128xf32>
    %16 = vector.shape_cast %15 : vector<1x128x128xf32> to vector<128x128xf32>
    %cst_15 = arith.constant dense<0.000000e+00> : vector<8x128xf32>
    %17 = tpu.matmul %14, %16, %cst_15 {dimension_numbers = #tpu.dot_dimension_numbers<[1], [0], [0], [1], [0, 0, 1, 1], [], []>} : vector<8x128xf32>, vector<128x128xf32>, vector<8x128xf32> -> vector<8x128xf32>
    %c2_16 = arith.constant 2 : index
    %c0_17 = arith.constant 0 : index
    %c0_18 = arith.constant 0 : index
    %18 = vector.load %arg3[%c2_16, %c0_17, %c0_18] : memref<6x1x128xf32, #tpu.memory_space<vmem>>, vector<1x1x128xf32>
    %19 = vector.shape_cast %18 : vector<1x1x128xf32> to vector<1x128xf32>
    %20 = vector.broadcast %19 : vector<1x128xf32> to vector<8x128xf32>
    %21 = arith.addf %17, %20 : vector<8x128xf32>
    %c3 = arith.constant 3 : index
    %c0_19 = arith.constant 0 : index
    %c0_20 = arith.constant 0 : index
    %22 = vector.load %arg2[%c3, %c0_19, %c0_20] : memref<6x128x128xf32, #tpu.memory_space<vmem>>, vector<1x128x128xf32>
    %23 = vector.shape_cast %22 : vector<1x128x128xf32> to vector<128x128xf32>
    %cst_21 = arith.constant dense<0.000000e+00> : vector<8x128xf32>
    %24 = tpu.matmul %21, %23, %cst_21 {dimension_numbers = #tpu.dot_dimension_numbers<[1], [0], [0], [1], [0, 0, 1, 1], [], []>} : vector<8x128xf32>, vector<128x128xf32>, vector<8x128xf32> -> vector<8x128xf32>
    %c3_22 = arith.constant 3 : index
    %c0_23 = arith.constant 0 : index
    %c0_24 = arith.constant 0 : index
    %25 = vector.load %arg3[%c3_22, %c0_23, %c0_24] : memref<6x1x128xf32, #tpu.memory_space<vmem>>, vector<1x1x128xf32>
    %26 = vector.shape_cast %25 : vector<1x1x128xf32> to vector<1x128xf32>
    %27 = vector.broadcast %26 : vector<1x128xf32> to vector<8x128xf32>
    %28 = arith.addf %24, %27 : vector<8x128xf32>
    %c4 = arith.constant 4 : index
    %c0_25 = arith.constant 0 : index
    %c0_26 = arith.constant 0 : index
    %29 = vector.load %arg2[%c4, %c0_25, %c0_26] : memref<6x128x128xf32, #tpu.memory_space<vmem>>, vector<1x128x128xf32>
    %30 = vector.shape_cast %29 : vector<1x128x128xf32> to vector<128x128xf32>
    %cst_27 = arith.constant dense<0.000000e+00> : vector<8x128xf32>
    %31 = tpu.matmul %28, %30, %cst_27 {dimension_numbers = #tpu.dot_dimension_numbers<[1], [0], [0], [1], [0, 0, 1, 1], [], []>} : vector<8x128xf32>, vector<128x128xf32>, vector<8x128xf32> -> vector<8x128xf32>
    %c4_28 = arith.constant 4 : index
    %c0_29 = arith.constant 0 : index
    %c0_30 = arith.constant 0 : index
    %32 = vector.load %arg3[%c4_28, %c0_29, %c0_30] : memref<6x1x128xf32, #tpu.memory_space<vmem>>, vector<1x1x128xf32>
    %33 = vector.shape_cast %32 : vector<1x1x128xf32> to vector<1x128xf32>
    %34 = vector.broadcast %33 : vector<1x128xf32> to vector<8x128xf32>
    %35 = arith.addf %31, %34 : vector<8x128xf32>
    %c5 = arith.constant 5 : index
    %c0_31 = arith.constant 0 : index
    %c0_32 = arith.constant 0 : index
    %36 = vector.load %arg2[%c5, %c0_31, %c0_32] : memref<6x128x128xf32, #tpu.memory_space<vmem>>, vector<1x128x128xf32>
    %37 = vector.shape_cast %36 : vector<1x128x128xf32> to vector<128x128xf32>
    %cst_33 = arith.constant dense<0.000000e+00> : vector<8x128xf32>
    %38 = tpu.matmul %35, %37, %cst_33 {dimension_numbers = #tpu.dot_dimension_numbers<[1], [0], [0], [1], [0, 0, 1, 1], [], []>} : vector<8x128xf32>, vector<128x128xf32>, vector<8x128xf32> -> vector<8x128xf32>
    %c5_34 = arith.constant 5 : index
    %c0_35 = arith.constant 0 : index
    %c0_36 = arith.constant 0 : index
    %39 = vector.load %arg3[%c5_34, %c0_35, %c0_36] : memref<6x1x128xf32, #tpu.memory_space<vmem>>, vector<1x1x128xf32>
    %40 = vector.shape_cast %39 : vector<1x1x128xf32> to vector<1x128xf32>
    %41 = vector.broadcast %40 : vector<1x128xf32> to vector<8x128xf32>
    %42 = arith.addf %38, %41 : vector<8x128xf32>
    %c0_37 = arith.constant 0 : index
    %c0_38 = arith.constant 0 : index
    %43 = vector.load %arg4[%c0_37, %c0_38] : memref<8x128xf32, #tpu.memory_space<vmem>>, vector<8x128xf32>
    tpu.vector_store %arg4[%c0_37, %c0_38], %42 {strides = array<i32>} : memref<8x128xf32, #tpu.memory_space<vmem>>, vector<8x128xf32>,
    return
  }
  func.func @transform_0(%arg0: i32) -> (i32, i32) {
    %c0_i32 = arith.constant 0 : i32
    %c0_i32_0 = arith.constant 0 : i32
    return %arg0, %c0_i32 : i32, i32
  }
  func.func @transform_1(%arg0: i32) -> (i32, i32, i32) {
    %c0_i32 = arith.constant 0 : i32
    %c0_i32_0 = arith.constant 0 : i32
    %c0_i32_1 = arith.constant 0 : i32
    %c0_i32_2 = arith.constant 0 : i32
    return %c0_i32, %c0_i32_0, %c0_i32_1 : i32, i32, i32
  }
  func.func @transform_2(%arg0: i32) -> (i32, i32, i32) {
    %c0_i32 = arith.constant 0 : i32
    %c0_i32_0 = arith.constant 0 : i32
    %c0_i32_1 = arith.constant 0 : i32
    %c0_i32_2 = arith.constant 0 : i32
    return %c0_i32, %c0_i32_0, %c0_i32_1 : i32, i32, i32
  }
  func.func @transform_3(%arg0: i32) -> (i32, i32) {
    %c0_i32 = arith.constant 0 : i32
    %c0_i32_0 = arith.constant 0 : i32
    return %arg0, %c0_i32 : i32, i32
  }
}

</mosaic_0001>

<llo_original>
// kernel: tpu_custom_call.1
$region0: #{tpu_custom_call.1}
  #allocation0 [shape = 'u32[]', space=smem, size = 0x4, offset = 0x4, fixed_abs, tag = 'smem constant byte address 0x4 - core index']
  #allocation1 [shape = 'u32[144,128]{1,0:T(1,128)}', space=vmem, size = 0x12000, scoped, tag = 'internal scratch']
  %s0 = inlined_call_operand.hbm [shape: f32[8,128], index: 0, kind: input, shape index: {}]
  %s1 = inlined_call_operand.hbm [shape: f32[6,128,128], index: 1, kind: input, shape index: {}]
  %s2 = inlined_call_operand.vmem [shape: f32[6,1,128], index: 2, kind: input, shape index: {}]
  %s3 = inlined_call_operand.hbm [shape: f32[8,128], index: 3, kind: output, shape index: {}]
  %s4 = sld [smem:[#allocation0]]
  $region30: #{tpu_custom_call.1} parent=0
    _
  %s6 = ssub.s32 1, %s4
  %s7 = scalar_select 0, %s6, %s4
  $region1: #{tpu_custom_call.1} parent=0
    #allocation2 [shape = 'u8[4096]{0}', space=vmem, size = 0x1000, scoped, tag = 'input window, operand 0, single buffered']
    #allocation3 [shape = 's32[1]{0}', space=sflag, size = 0x4, scoped, tag = 'scoped memory for tpu_custom_call.1']
    #allocation4 [shape = 's32[1]{0}', space=sflag, size = 0x4, scoped, tag = 'scoped memory for tpu_custom_call.1']
    #allocation5 [shape = 'u8[393216]{0}', space=vmem, size = 0x60000, scoped, tag = 'input window, operand 1, single buffered']
    #allocation6 [shape = 's32[1]{0}', space=sflag, size = 0x4, scoped, tag = 'scoped memory for tpu_custom_call.1']
    #allocation7 [shape = 'u8[4096]{0}', space=vmem, size = 0x1000, scoped, tag = 'output window, operand 0, single buffered']
    %8 = vsyncpa [#allocation3], 0
    %9 = vsyncpa [#allocation6], 0
    %10 = vsyncpa [#allocation4], 0
    // Predicated region
    $region2: #{tpu_custom_call.1} parent=1 // pred_check
      _
    $region3: #{tpu_custom_call.1} parent=1 // pred_check_branch
      %12 = sbr.rel (0) target = $region5
    $region4: #{tpu_custom_call.1} parent=1 // pred_region
      %s14 = ssub.s32 128, 128
      %15 = vsyncadd [#allocation3], %s14
      %s17 = sshll.u32 [#allocation2], 4
      %s18 = int_to_ptr.vmem [resolvable:$true] %s17
      %20 = dma.hbm_to_vmem [thread:$0]  %s0, 128, %s18, [#allocation3]
    $region5: #{tpu_custom_call.1} parent=1 // pred_fallthru
      _
    // Predicated region
    $region6: #{tpu_custom_call.1} parent=1 // pred_check
      _
    $region7: #{tpu_custom_call.1} parent=1 // pred_check_branch
      %22 = sbr.rel (0) target = $region9
    $region8: #{tpu_custom_call.1} parent=1 // pred_region
      %s24 = ssub.s32 12288, 12288
      %25 = vsyncadd [#allocation6], %s24
      %s26 = sshll.u32 [#allocation5], 4
      %s27 = int_to_ptr.vmem [resolvable:$true] %s26
      %32 = dma.hbm_to_vmem [thread:$0]  %s1, 12288, %s27, [#allocation6], 128, 128, 8
    $region9: #{tpu_custom_call.1} parent=1 // pred_fallthru
      _
    // Predicated region
    $region10: #{tpu_custom_call.1} parent=1 // pred_check
      _
    $region11: #{tpu_custom_call.1} parent=1 // pred_check_branch
      %34 = sbr.rel (0) target = $region13
    $region12: #{tpu_custom_call.1} parent=1 // pred_region
      _
    $region13: #{tpu_custom_call.1} parent=1 // pred_fallthru
      _
    // Predicated region
    $region14: #{tpu_custom_call.1} parent=1 // pred_check
      _
    $region15: #{tpu_custom_call.1} parent=1 // pred_check_branch
      %36 = sbr.rel (0) target = $region17
    $region16: #{tpu_custom_call.1} parent=1 // pred_region
      %37 = dma.done [#allocation3], 128
    $region17: #{tpu_custom_call.1} parent=1 // pred_fallthru
      _
    // Predicated region
    $region18: #{tpu_custom_call.1} parent=1 // pred_check
      _
    $region19: #{tpu_custom_call.1} parent=1 // pred_check_branch
      %39 = sbr.rel (0) target = $region21
    $region20: #{tpu_custom_call.1} parent=1 // pred_region
      %40 = dma.done [#allocation6], 12288
    $region21: #{tpu_custom_call.1} parent=1 // pred_fallthru
      _
    %v41 = vld [vmem:[#allocation2] sm:$0xff]
    %v42 = vld [vmem:[#allocation5] sm:$0xff]
    %v43 = vld [vmem:[#allocation5 + $0x8] sm:$0xff]
    %v44 = vld [vmem:[#allocation5 + $0x10] sm:$0xff]
    %v45 = vld [vmem:[#allocation5 + $0x18] sm:$0xff]
    %v46 = vld [vmem:[#allocation5 + $0x20] sm:$0xff]
    %v47 = vld [vmem:[#allocation5 + $0x28] sm:$0xff]
    %v48 = vld [vmem:[#allocation5 + $0x30] sm:$0xff]
    %v49 = vld [vmem:[#allocation5 + $0x38] sm:$0xff]
    %v50 = vld [vmem:[#allocation5 + $0x40] sm:$0xff]
    %v51 = vld [vmem:[#allocation5 + $0x48] sm:$0xff]
    %v52 = vld [vmem:[#allocation5 + $0x50] sm:$0xff]
    %v53 = vld [vmem:[#allocation5 + $0x58] sm:$0xff]
    %v54 = vld [vmem:[#allocation5 + $0x60] sm:$0xff]
    %v55 = vld [vmem:[#allocation5 + $0x68] sm:$0xff]
    %v56 = vld [vmem:[#allocation5 + $0x70] sm:$0xff]
    %v57 = vld [vmem:[#allocation5 + $0x78] sm:$0xff]
    %v58 = vld [vmem:[%s2] sm:$0x1]
    %v60 = vlaneseq
    %v61 = vshrl.u32 %v60, 7
    %v62 = vsub.s32 0, %v61
    %v63 = vrot.slane %v58, %v62
    %65 = vmatprep.subr.mxu0 0.0
    %66 = vmatpush1.msra.mxu0 %v42
    %67 = vmatprep.subr.mxu0 0.0
    %68 = vmatpush1.msra.mxu0 %v43
    %69 = vmatprep.subr.mxu0 0.0
    %70 = vmatpush1.msra.mxu0 %v44
    %71 = vmatprep.subr.mxu0 0.0
    %72 = vmatpush1.msra.mxu0 %v45
    %73 = vmatprep.subr.mxu0 0.0
    %74 = vmatpush1.msra.mxu0 %v46
    %75 = vmatprep.subr.mxu0 0.0
    %76 = vmatpush1.msra.mxu0 %v47
    %77 = vmatprep.subr.mxu0 0.0
    %78 = vmatpush1.msra.mxu0 %v48
    %79 = vmatprep.subr.mxu0 0.0
    %80 = vmatpush1.msra.mxu0 %v49
    %81 = vmatprep.subr.mxu0 0.0
    %82 = vmatpush1.msra.mxu0 %v50
    %83 = vmatprep.subr.mxu0 0.0
    %84 = vmatpush1.msra.mxu0 %v51
    %85 = vmatprep.subr.mxu0 0.0
    %86 = vmatpush1.msra.mxu0 %v52
    %87 = vmatprep.subr.mxu0 0.0
    %88 = vmatpush1.msra.mxu0 %v53
    %89 = vmatprep.subr.mxu0 0.0
    %90 = vmatpush1.msra.mxu0 %v54
    %91 = vmatprep.subr.mxu0 0.0
    %92 = vmatpush1.msra.mxu0 %v55
    %93 = vmatprep.subr.mxu0 0.0
    %94 = vmatpush1.msra.mxu0 %v56
    %95 = vmatprep.subr.mxu0 0.0
    %96 = vmatpush1.msra.mxu0 %v57
    %97 = vmatprep.subr.mxu0 0.0
    %98 = vmatpush1.msra.mxu0 0.0
    %99 = vmatprep.subr.mxu0 0.0
    %100 = vmatpush1.msra.mxu0 0.0
    %101 = vmatprep.subr.mxu0 0.0
    %102 = vmatpush1.msra.mxu0 0.0
    %103 = vmatprep.subr.mxu0 0.0
    %104 = vmatpush1.msra.mxu0 0.0
    %105 = vmatprep.subr.mxu0 0.0
    %106 = vmatpush1.msra.mxu0 0.0
    %107 = vmatprep.subr.mxu0 0.0
    %108 = vmatpush1.msra.mxu0 0.0
    %109 = vmatprep.subr.mxu0 0.0
    %110 = vmatpush1.msra.mxu0 0.0
    %111 = vmatprep.subr.mxu0 0.0
    %112 = vmatpush1.msra.mxu0 0.0
    %113 = vmatprep.subr.mxu0 0.0
    %114 = vmatpush1.msra.mxu0 0.0
    %115 = vmatprep.subr.mxu0 0.0
    %116 = vmatpush1.msra.mxu0 0.0
    %117 = vmatprep.subr.mxu0 0.0
    %118 = vmatpush1.msra.mxu0 0.0
    %119 = vmatprep.subr.mxu0 0.0
    %120 = vmatpush1.msra.mxu0 0.0
    %121 = vmatprep.subr.mxu0 0.0
    %122 = vmatpush1.msra.mxu0 0.0
    %123 = vmatprep.subr.mxu0 0.0
    %124 = vmatpush1.msra.mxu0 0.0
    %125 = vmatprep.subr.mxu0 0.0
    %126 = vmatpush1.msra.mxu0 0.0
    %127 = vmatprep.subr.mxu0 0.0
    %128 = vmatpush1.msra.mxu0 0.0
    %129 = vmatprep.mubr.f32.mxu0 0.0
    %130 = vmatmul.mubr.f32.gmra.mrb[0].mxu0 %v41
    %v131 = vpop.f32.mrb[0].mxu0
    %v132 = vadd.f32 %v63, %v131
    %v133 = vpop.f32.mrb[0].mxu0
    %134 = vdwg.mxu0
    %s135 = scalar_lea.vmem [#allocation5], 128
    %v136 = vld [vmem:[%s135] sm:$0xff]
    %v137 = vld [vmem:[%s135 + $0x8] sm:$0xff]
    %v138 = vld [vmem:[%s135 + $0x10] sm:$0xff]
    %v139 = vld [vmem:[%s135 + $0x18] sm:$0xff]
    %v140 = vld [vmem:[%s135 + $0x20] sm:$0xff]
    %v141 = vld [vmem:[%s135 + $0x28] sm:$0xff]
    %v142 = vld [vmem:[%s135 + $0x30] sm:$0xff]
    %v143 = vld [vmem:[%s135 + $0x38] sm:$0xff]
    %v144 = vld [vmem:[%s135 + $0x40] sm:$0xff]
    %v145 = vld [vmem:[%s135 + $0x48] sm:$0xff]
    %v146 = vld [vmem:[%s135 + $0x50] sm:$0xff]
    %v147 = vld [vmem:[%s135 + $0x58] sm:$0xff]
    %v148 = vld [vmem:[%s135 + $0x60] sm:$0xff]
    %v149 = vld [vmem:[%s135 + $0x68] sm:$0xff]
    %v150 = vld [vmem:[%s135 + $0x70] sm:$0xff]
    %v151 = vld [vmem:[%s135 + $0x78] sm:$0xff]
    %s152 = scalar_lea.vmem %s2, 1
    %v153 = vld [vmem:[%s152] sm:$0x1]
    %v155 = vlaneseq
    %v156 = vshrl.u32 %v155, 7
    %v157 = vsub.s32 0, %v156
    %v158 = vrot.slane %v153, %v157
    %160 = vmatprep.subr.mxu0 0.0
    %161 = vmatpush1.msra.mxu0 %v136
    %162 = vmatprep.subr.mxu0 0.0
    %163 = vmatpush1.msra.mxu0 %v137
    %164 = vmatprep.subr.mxu0 0.0
    %165 = vmatpush1.msra.mxu0 %v138
    %166 = vmatprep.subr.mxu0 0.0
    %167 = vmatpush1.msra.mxu0 %v139
    %168 = vmatprep.subr.mxu0 0.0
    %169 = vmatpush1.msra.mxu0 %v140
    %170 = vmatprep.subr.mxu0 0.0
    %171 = vmatpush1.msra.mxu0 %v141
    %172 = vmatprep.subr.mxu0 0.0
    %173 = vmatpush1.msra.mxu0 %v142
    %174 = vmatprep.subr.mxu0 0.0
    %175 = vmatpush1.msra.mxu0 %v143
    %176 = vmatprep.subr.mxu0 0.0
    %177 = vmatpush1.msra.mxu0 %v144
    %178 = vmatprep.subr.mxu0 0.0
    %179 = vmatpush1.msra.mxu0 %v145
    %180 = vmatprep.subr.mxu0 0.0
    %181 = vmatpush1.msra.mxu0 %v146
    %182 = vmatprep.subr.mxu0 0.0
    %183 = vmatpush1.msra.mxu0 %v147
    %184 = vmatprep.subr.mxu0 0.0
    %185 = vmatpush1.msra.mxu0 %v148
    %186 = vmatprep.subr.mxu0 0.0
    %187 = vmatpush1.msra.mxu0 %v149
    %188 = vmatprep.subr.mxu0 0.0
    %189 = vmatpush1.msra.mxu0 %v150
    %190 = vmatprep.subr.mxu0 0.0
    %191 = vmatpush1.msra.mxu0 %v151
    %192 = vmatprep.subr.mxu0 0.0
    %193 = vmatpush1.msra.mxu0 0.0
    %194 = vmatprep.subr.mxu0 0.0
    %195 = vmatpush1.msra.mxu0 0.0
    %196 = vmatprep.subr.mxu0 0.0
    %197 = vmatpush1.msra.mxu0 0.0
    %198 = vmatprep.subr.mxu0 0.0
    %199 = vmatpush1.msra.mxu0 0.0
    %200 = vmatprep.subr.mxu0 0.0
    %201 = vmatpush1.msra.mxu0 0.0
    %202 = vmatprep.subr.mxu0 0.0
    %203 = vmatpush1.msra.mxu0 0.0
    %204 = vmatprep.subr.mxu0 0.0
    %205 = vmatpush1.msra.mxu0 0.0
    %206 = vmatprep.subr.mxu0 0.0
    %207 = vmatpush1.msra.mxu0 0.0
    %208 = vmatprep.subr.mxu0 0.0
    %209 = vmatpush1.msra.mxu0 0.0
    %210 = vmatprep.subr.mxu0 0.0
    %211 = vmatpush1.msra.mxu0 0.0
    %212 = vmatprep.subr.mxu0 0.0
    %213 = vmatpush1.msra.mxu0 0.0
    %214 = vmatprep.subr.mxu0 0.0
    %215 = vmatpush1.msra.mxu0 0.0
    %216 = vmatprep.subr.mxu0 0.0
    %217 = vmatpush1.msra.mxu0 0.0
    %218 = vmatprep.subr.mxu0 0.0
    %219 = vmatpush1.msra.mxu0 0.0
    %220 = vmatprep.subr.mxu0 0.0
    %221 = vmatpush1.msra.mxu0 0.0
    %222 = vmatprep.subr.mxu0 0.0
    %223 = vmatpush1.msra.mxu0 0.0
    %224 = vmatprep.mubr.f32.mxu0 0.0
    %225 = vmatmul.mubr.f32.gmra.mrb[0].mxu0 %v132
    %v226 = vpop.f32.mrb[0].mxu0
    %v227 = vadd.f32 %v158, %v226
    %v228 = vpop.f32.mrb[0].mxu0
    %229 = vdwg.mxu0
    %s230 = scalar_lea.vmem [#allocation5], 256
    %v231 = vld [vmem:[%s230] sm:$0xff]
    %v232 = vld [vmem:[%s230 + $0x8] sm:$0xff]
    %v233 = vld [vmem:[%s230 + $0x10] sm:$0xff]
    %v234 = vld [vmem:[%s230 + $0x18] sm:$0xff]
    %v235 = vld [vmem:[%s230 + $0x20] sm:$0xff]
    %v236 = vld [vmem:[%s230 + $0x28] sm:$0xff]
    %v237 = vld [vmem:[%s230 + $0x30] sm:$0xff]
    %v238 = vld [vmem:[%s230 + $0x38] sm:$0xff]
    %v239 = vld [vmem:[%s230 + $0x40] sm:$0xff]
    %v240 = vld [vmem:[%s230 + $0x48] sm:$0xff]
    %v241 = vld [vmem:[%s230 + $0x50] sm:$0xff]
    %v242 = vld [vmem:[%s230 + $0x58] sm:$0xff]
    %v243 = vld [vmem:[%s230 + $0x60] sm:$0xff]
    %v244 = vld [vmem:[%s230 + $0x68] sm:$0xff]
    %v245 = vld [vmem:[%s230 + $0x70] sm:$0xff]
    %v246 = vld [vmem:[%s230 + $0x78] sm:$0xff]
    %s247 = scalar_lea.vmem %s2, 2
    %v248 = vld [vmem:[%s247] sm:$0x1]
    %v250 = vlaneseq
    %v251 = vshrl.u32 %v250, 7
    %v252 = vsub.s32 0, %v251
    %v253 = vrot.slane %v248, %v252
    %255 = vmatprep.subr.mxu0 0.0
    %256 = vmatpush1.msra.mxu0 %v231
    %257 = vmatprep.subr.mxu0 0.0
    %258 = vmatpush1.msra.mxu0 %v232
    %259 = vmatprep.subr.mxu0 0.0
    %260 = vmatpush1.msra.mxu0 %v233
    %261 = vmatprep.subr.mxu0 0.0
    %262 = vmatpush1.msra.mxu0 %v234
    %263 = vmatprep.subr.mxu0 0.0
    %264 = vmatpush1.msra.mxu0 %v235
    %265 = vmatprep.subr.mxu0 0.0
    %266 = vmatpush1.msra.mxu0 %v236
    %267 = vmatprep.subr.mxu0 0.0
    %268 = vmatpush1.msra.mxu0 %v237
    %269 = vmatprep.subr.mxu0 0.0
    %270 = vmatpush1.msra.mxu0 %v238
    %271 = vmatprep.subr.mxu0 0.0
    %272 = vmatpush1.msra.mxu0 %v239
    %273 = vmatprep.subr.mxu0 0.0
    %274 = vmatpush1.msra.mxu0 %v240
    %275 = vmatprep.subr.mxu0 0.0
    %276 = vmatpush1.msra.mxu0 %v241
    %277 = vmatprep.subr.mxu0 0.0
    %278 = vmatpush1.msra.mxu0 %v242
    %279 = vmatprep.subr.mxu0 0.0
    %280 = vmatpush1.msra.mxu0 %v243
    %281 = vmatprep.subr.mxu0 0.0
    %282 = vmatpush1.msra.mxu0 %v244
    %283 = vmatprep.subr.mxu0 0.0
    %284 = vmatpush1.msra.mxu0 %v245
    %285 = vmatprep.subr.mxu0 0.0
    %286 = vmatpush1.msra.mxu0 %v246
    %287 = vmatprep.subr.mxu0 0.0
    %288 = vmatpush1.msra.mxu0 0.0
    %289 = vmatprep.subr.mxu0 0.0
    %290 = vmatpush1.msra.mxu0 0.0
    %291 = vmatprep.subr.mxu0 0.0
    %292 = vmatpush1.msra.mxu0 0.0
    %293 = vmatprep.subr.mxu0 0.0
    %294 = vmatpush1.msra.mxu0 0.0
    %295 = vmatprep.subr.mxu0 0.0
    %296 = vmatpush1.msra.mxu0 0.0
    %297 = vmatprep.subr.mxu0 0.0
    %298 = vmatpush1.msra.mxu0 0.0
    %299 = vmatprep.subr.mxu0 0.0
    %300 = vmatpush1.msra.mxu0 0.0
    %301 = vmatprep.subr.mxu0 0.0
    %302 = vmatpush1.msra.mxu0 0.0
    %303 = vmatprep.subr.mxu0 0.0
    %304 = vmatpush1.msra.mxu0 0.0
    %305 = vmatprep.subr.mxu0 0.0
    %306 = vmatpush1.msra.mxu0 0.0
    %307 = vmatprep.subr.mxu0 0.0
    %308 = vmatpush1.msra.mxu0 0.0
    %309 = vmatprep.subr.mxu0 0.0
    %310 = vmatpush1.msra.mxu0 0.0
    %311 = vmatprep.subr.mxu0 0.0
    %312 = vmatpush1.msra.mxu0 0.0
    %313 = vmatprep.subr.mxu0 0.0
    %314 = vmatpush1.msra.mxu0 0.0
    %315 = vmatprep.subr.mxu0 0.0
    %316 = vmatpush1.msra.mxu0 0.0
    %317 = vmatprep.subr.mxu0 0.0
    %318 = vmatpush1.msra.mxu0 0.0
    %319 = vmatprep.mubr.f32.mxu0 0.0
    %320 = vmatmul.mubr.f32.gmra.mrb[0].mxu0 %v227
    %v321 = vpop.f32.mrb[0].mxu0
    %v322 = vadd.f32 %v253, %v321
    %v323 = vpop.f32.mrb[0].mxu0
    %324 = vdwg.mxu0
    %s325 = scalar_lea.vmem [#allocation5], 384
    %v326 = vld [vmem:[%s325] sm:$0xff]
    %v327 = vld [vmem:[%s325 + $0x8] sm:$0xff]
    %v328 = vld [vmem:[%s325 + $0x10] sm:$0xff]
    %v329 = vld [vmem:[%s325 + $0x18] sm:$0xff]
    %v330 = vld [vmem:[%s325 + $0x20] sm:$0xff]
    %v331 = vld [vmem:[%s325 + $0x28] sm:$0xff]
    %v332 = vld [vmem:[%s325 + $0x30] sm:$0xff]
    %v333 = vld [vmem:[%s325 + $0x38] sm:$0xff]
    %v334 = vld [vmem:[%s325 + $0x40] sm:$0xff]
    %v335 = vld [vmem:[%s325 + $0x48] sm:$0xff]
    %v336 = vld [vmem:[%s325 + $0x50] sm:$0xff]
    %v337 = vld [vmem:[%s325 + $0x58] sm:$0xff]
    %v338 = vld [vmem:[%s325 + $0x60] sm:$0xff]
    %v339 = vld [vmem:[%s325 + $0x68] sm:$0xff]
    %v340 = vld [vmem:[%s325 + $0x70] sm:$0xff]
    %v341 = vld [vmem:[%s325 + $0x78] sm:$0xff]
    %s342 = scalar_lea.vmem %s2, 3
    %v343 = vld [vmem:[%s342] sm:$0x1]
    %v345 = vlaneseq
    %v346 = vshrl.u32 %v345, 7
    %v347 = vsub.s32 0, %v346
    %v348 = vrot.slane %v343, %v347
    %350 = vmatprep.subr.mxu0 0.0
    %351 = vmatpush1.msra.mxu0 %v326
    %352 = vmatprep.subr.mxu0 0.0
    %353 = vmatpush1.msra.mxu0 %v327
    %354 = vmatprep.subr.mxu0 0.0
    %355 = vmatpush1.msra.mxu0 %v328
    %356 = vmatprep.subr.mxu0 0.0
    %357 = vmatpush1.msra.mxu0 %v329
    %358 = vmatprep.subr.mxu0 0.0
    %359 = vmatpush1.msra.mxu0 %v330
    %360 = vmatprep.subr.mxu0 0.0
    %361 = vmatpush1.msra.mxu0 %v331
    %362 = vmatprep.subr.mxu0 0.0
    %363 = vmatpush1.msra.mxu0 %v332
    %364 = vmatprep.subr.mxu0 0.0
    %365 = vmatpush1.msra.mxu0 %v333
    %366 = vmatprep.subr.mxu0 0.0
    %367 = vmatpush1.msra.mxu0 %v334
    %368 = vmatprep.subr.mxu0 0.0
    %369 = vmatpush1.msra.mxu0 %v335
    %370 = vmatprep.subr.mxu0 0.0
    %371 = vmatpush1.msra.mxu0 %v336
    %372 = vmatprep.subr.mxu0 0.0
    %373 = vmatpush1.msra.mxu0 %v337
    %374 = vmatprep.subr.mxu0 0.0
    %375 = vmatpush1.msra.mxu0 %v338
    %376 = vmatprep.subr.mxu0 0.0
    %377 = vmatpush1.msra.mxu0 %v339
    %378 = vmatprep.subr.mxu0 0.0
    %379 = vmatpush1.msra.mxu0 %v340
    %380 = vmatprep.subr.mxu0 0.0
    %381 = vmatpush1.msra.mxu0 %v341
    %382 = vmatprep.subr.mxu0 0.0
    %383 = vmatpush1.msra.mxu0 0.0
    %384 = vmatprep.subr.mxu0 0.0
    %385 = vmatpush1.msra.mxu0 0.0
    %386 = vmatprep.subr.mxu0 0.0
    %387 = vmatpush1.msra.mxu0 0.0
    %388 = vmatprep.subr.mxu0 0.0
    %389 = vmatpush1.msra.mxu0 0.0
    %390 = vmatprep.subr.mxu0 0.0
    %391 = vmatpush1.msra.mxu0 0.0
    %392 = vmatprep.subr.mxu0 0.0
    %393 = vmatpush1.msra.mxu0 0.0
    %394 = vmatprep.subr.mxu0 0.0
    %395 = vmatpush1.msra.mxu0 0.0
    %396 = vmatprep.subr.mxu0 0.0
    %397 = vmatpush1.msra.mxu0 0.0
    %398 = vmatprep.subr.mxu0 0.0
    %399 = vmatpush1.msra.mxu0 0.0
    %400 = vmatprep.subr.mxu0 0.0
    %401 = vmatpush1.msra.mxu0 0.0
    %402 = vmatprep.subr.mxu0 0.0
    %403 = vmatpush1.msra.mxu0 0.0
    %404 = vmatprep.subr.mxu0 0.0
    %405 = vmatpush1.msra.mxu0 0.0
    %406 = vmatprep.subr.mxu0 0.0
    %407 = vmatpush1.msra.mxu0 0.0
    %408 = vmatprep.subr.mxu0 0.0
    %409 = vmatpush1.msra.mxu0 0.0
    %410 = vmatprep.subr.mxu0 0.0
    %411 = vmatpush1.msra.mxu0 0.0
    %412 = vmatprep.subr.mxu0 0.0
    %413 = vmatpush1.msra.mxu0 0.0
    %414 = vmatprep.mubr.f32.mxu0 0.0
    %415 = vmatmul.mubr.f32.gmra.mrb[0].mxu0 %v322
    %v416 = vpop.f32.mrb[0].mxu0
    %v417 = vadd.f32 %v348, %v416
    %v418 = vpop.f32.mrb[0].mxu0
    %419 = vdwg.mxu0
    %s420 = scalar_lea.vmem [#allocation5], 512
    %v421 = vld [vmem:[%s420] sm:$0xff]
    %v422 = vld [vmem:[%s420 + $0x8] sm:$0xff]
    %v423 = vld [vmem:[%s420 + $0x10] sm:$0xff]
    %v424 = vld [vmem:[%s420 + $0x18] sm:$0xff]
    %v425 = vld [vmem:[%s420 + $0x20] sm:$0xff]
    %v426 = vld [vmem:[%s420 + $0x28] sm:$0xff]
    %v427 = vld [vmem:[%s420 + $0x30] sm:$0xff]
    %v428 = vld [vmem:[%s420 + $0x38] sm:$0xff]
    %v429 = vld [vmem:[%s420 + $0x40] sm:$0xff]
    %v430 = vld [vmem:[%s420 + $0x48] sm:$0xff]
    %v431 = vld [vmem:[%s420 + $0x50] sm:$0xff]
    %v432 = vld [vmem:[%s420 + $0x58] sm:$0xff]
    %v433 = vld [vmem:[%s420 + $0x60] sm:$0xff]
    %v434 = vld [vmem:[%s420 + $0x68] sm:$0xff]
    %v435 = vld [vmem:[%s420 + $0x70] sm:$0xff]
    %v436 = vld [vmem:[%s420 + $0x78] sm:$0xff]
    %s437 = scalar_lea.vmem %s2, 4
    %v438 = vld [vmem:[%s437] sm:$0x1]
    %v440 = vlaneseq
    %v441 = vshrl.u32 %v440, 7
    %v442 = vsub.s32 0, %v441
    %v443 = vrot.slane %v438, %v442
    %445 = vmatprep.subr.mxu0 0.0
    %446 = vmatpush1.msra.mxu0 %v421
    %447 = vmatprep.subr.mxu0 0.0
    %448 = vmatpush1.msra.mxu0 %v422
    %449 = vmatprep.subr.mxu0 0.0
    %450 = vmatpush1.msra.mxu0 %v423
    %451 = vmatprep.subr.mxu0 0.0
    %452 = vmatpush1.msra.mxu0 %v424
    %453 = vmatprep.subr.mxu0 0.0
    %454 = vmatpush1.msra.mxu0 %v425
    %455 = vmatprep.subr.mxu0 0.0
    %456 = vmatpush1.msra.mxu0 %v426
    %457 = vmatprep.subr.mxu0 0.0
    %458 = vmatpush1.msra.mxu0 %v427
    %459 = vmatprep.subr.mxu0 0.0
    %460 = vmatpush1.msra.mxu0 %v428
    %461 = vmatprep.subr.mxu0 0.0
    %462 = vmatpush1.msra.mxu0 %v429
    %463 = vmatprep.subr.mxu0 0.0
    %464 = vmatpush1.msra.mxu0 %v430
    %465 = vmatprep.subr.mxu0 0.0
    %466 = vmatpush1.msra.mxu0 %v431
    %467 = vmatprep.subr.mxu0 0.0
    %468 = vmatpush1.msra.mxu0 %v432
    %469 = vmatprep.subr.mxu0 0.0
    %470 = vmatpush1.msra.mxu0 %v433
    %471 = vmatprep.subr.mxu0 0.0
    %472 = vmatpush1.msra.mxu0 %v434
    %473 = vmatprep.subr.mxu0 0.0
    %474 = vmatpush1.msra.mxu0 %v435
    %475 = vmatprep.subr.mxu0 0.0
    %476 = vmatpush1.msra.mxu0 %v436
    %477 = vmatprep.subr.mxu0 0.0
    %478 = vmatpush1.msra.mxu0 0.0
    %479 = vmatprep.subr.mxu0 0.0
    %480 = vmatpush1.msra.mxu0 0.0
    %481 = vmatprep.subr.mxu0 0.0
    %482 = vmatpush1.msra.mxu0 0.0
    %483 = vmatprep.subr.mxu0 0.0
    %484 = vmatpush1.msra.mxu0 0.0
    %485 = vmatprep.subr.mxu0 0.0
    %486 = vmatpush1.msra.mxu0 0.0
    %487 = vmatprep.subr.mxu0 0.0
    %488 = vmatpush1.msra.mxu0 0.0
    %489 = vmatprep.subr.mxu0 0.0
    %490 = vmatpush1.msra.mxu0 0.0
    %491 = vmatprep.subr.mxu0 0.0
    %492 = vmatpush1.msra.mxu0 0.0
    %493 = vmatprep.subr.mxu0 0.0
    %494 = vmatpush1.msra.mxu0 0.0
    %495 = vmatprep.subr.mxu0 0.0
    %496 = vmatpush1.msra.mxu0 0.0
    %497 = vmatprep.subr.mxu0 0.0
    %498 = vmatpush1.msra.mxu0 0.0
    %499 = vmatprep.subr.mxu0 0.0
    %500 = vmatpush1.msra.mxu0 0.0
    %501 = vmatprep.subr.mxu0 0.0
    %502 = vmatpush1.msra.mxu0 0.0
    %503 = vmatprep.subr.mxu0 0.0
    %504 = vmatpush1.msra.mxu0 0.0
    %505 = vmatprep.subr.mxu0 0.0
    %506 = vmatpush1.msra.mxu0 0.0
    %507 = vmatprep.subr.mxu0 0.0
    %508 = vmatpush1.msra.mxu0 0.0
    %509 = vmatprep.mubr.f32.mxu0 0.0
    %510 = vmatmul.mubr.f32.gmra.mrb[0].mxu0 %v417
    %v511 = vpop.f32.mrb[0].mxu0
    %v512 = vadd.f32 %v443, %v511
    %v513 = vpop.f32.mrb[0].mxu0
    %514 = vdwg.mxu0
    %s515 = scalar_lea.vmem [#allocation5], 640
    %v516 = vld [vmem:[%s515] sm:$0xff]
    %v517 = vld [vmem:[%s515 + $0x8] sm:$0xff]
    %v518 = vld [vmem:[%s515 + $0x10] sm:$0xff]
    %v519 = vld [vmem:[%s515 + $0x18] sm:$0xff]
    %v520 = vld [vmem:[%s515 + $0x20] sm:$0xff]
    %v521 = vld [vmem:[%s515 + $0x28] sm:$0xff]
    %v522 = vld [vmem:[%s515 + $0x30] sm:$0xff]
    %v523 = vld [vmem:[%s515 + $0x38] sm:$0xff]
    %v524 = vld [vmem:[%s515 + $0x40] sm:$0xff]
    %v525 = vld [vmem:[%s515 + $0x48] sm:$0xff]
    %v526 = vld [vmem:[%s515 + $0x50] sm:$0xff]
    %v527 = vld [vmem:[%s515 + $0x58] sm:$0xff]
    %v528 = vld [vmem:[%s515 + $0x60] sm:$0xff]
    %v529 = vld [vmem:[%s515 + $0x68] sm:$0xff]
    %v530 = vld [vmem:[%s515 + $0x70] sm:$0xff]
    %v531 = vld [vmem:[%s515 + $0x78] sm:$0xff]
    %s532 = scalar_lea.vmem %s2, 5
    %v533 = vld [vmem:[%s532] sm:$0x1]
    %v535 = vlaneseq
    %v536 = vshrl.u32 %v535, 7
    %v537 = vsub.s32 0, %v536
    %v538 = vrot.slane %v533, %v537
    %540 = vmatprep.subr.mxu0 0.0
    %541 = vmatpush1.msra.mxu0 %v516
    %542 = vmatprep.subr.mxu0 0.0
    %543 = vmatpush1.msra.mxu0 %v517
    %544 = vmatprep.subr.mxu0 0.0
    %545 = vmatpush1.msra.mxu0 %v518
    %546 = vmatprep.subr.mxu0 0.0
    %547 = vmatpush1.msra.mxu0 %v519
    %548 = vmatprep.subr.mxu0 0.0
    %549 = vmatpush1.msra.mxu0 %v520
    %550 = vmatprep.subr.mxu0 0.0
    %551 = vmatpush1.msra.mxu0 %v521
    %552 = vmatprep.subr.mxu0 0.0
    %553 = vmatpush1.msra.mxu0 %v522
    %554 = vmatprep.subr.mxu0 0.0
    %555 = vmatpush1.msra.mxu0 %v523
    %556 = vmatprep.subr.mxu0 0.0
    %557 = vmatpush1.msra.mxu0 %v524
    %558 = vmatprep.subr.mxu0 0.0
    %559 = vmatpush1.msra.mxu0 %v525
    %560 = vmatprep.subr.mxu0 0.0
    %561 = vmatpush1.msra.mxu0 %v526
    %562 = vmatprep.subr.mxu0 0.0
    %563 = vmatpush1.msra.mxu0 %v527
    %564 = vmatprep.subr.mxu0 0.0
    %565 = vmatpush1.msra.mxu0 %v528
    %566 = vmatprep.subr.mxu0 0.0
    %567 = vmatpush1.msra.mxu0 %v529
    %568 = vmatprep.subr.mxu0 0.0
    %569 = vmatpush1.msra.mxu0 %v530
    %570 = vmatprep.subr.mxu0 0.0
    %571 = vmatpush1.msra.mxu0 %v531
    %572 = vmatprep.subr.mxu0 0.0
    %573 = vmatpush1.msra.mxu0 0.0
    %574 = vmatprep.subr.mxu0 0.0
    %575 = vmatpush1.msra.mxu0 0.0
    %576 = vmatprep.subr.mxu0 0.0
    %577 = vmatpush1.msra.mxu0 0.0
    %578 = vmatprep.subr.mxu0 0.0
    %579 = vmatpush1.msra.mxu0 0.0
    %580 = vmatprep.subr.mxu0 0.0
    %581 = vmatpush1.msra.mxu0 0.0
    %582 = vmatprep.subr.mxu0 0.0
    %583 = vmatpush1.msra.mxu0 0.0
    %584 = vmatprep.subr.mxu0 0.0
    %585 = vmatpush1.msra.mxu0 0.0
    %586 = vmatprep.subr.mxu0 0.0
    %587 = vmatpush1.msra.mxu0 0.0
    %588 = vmatprep.subr.mxu0 0.0
    %589 = vmatpush1.msra.mxu0 0.0
    %590 = vmatprep.subr.mxu0 0.0
    %591 = vmatpush1.msra.mxu0 0.0
    %592 = vmatprep.subr.mxu0 0.0
    %593 = vmatpush1.msra.mxu0 0.0
    %594 = vmatprep.subr.mxu0 0.0
    %595 = vmatpush1.msra.mxu0 0.0
    %596 = vmatprep.subr.mxu0 0.0
    %597 = vmatpush1.msra.mxu0 0.0
    %598 = vmatprep.subr.mxu0 0.0
    %599 = vmatpush1.msra.mxu0 0.0
    %600 = vmatprep.subr.mxu0 0.0
    %601 = vmatpush1.msra.mxu0 0.0
    %602 = vmatprep.subr.mxu0 0.0
    %603 = vmatpush1.msra.mxu0 0.0
    %604 = vmatprep.mubr.f32.mxu0 0.0
    %605 = vmatmul.mubr.f32.gmra.mrb[0].mxu0 %v512
    %v606 = vpop.f32.mrb[0].mxu0
    %v607 = vadd.f32 %v538, %v606
    %v608 = vpop.f32.mrb[0].mxu0
    %609 = vdwg.mxu0
    %610 = vst [vmem:[#allocation7] sm:$0xff] %v607
    // Predicated region
    $region22: #{tpu_custom_call.1} parent=1 // pred_check
      _
    $region23: #{tpu_custom_call.1} parent=1 // pred_check_branch
      %612 = sbr.rel (0) target = $region25
    $region24: #{tpu_custom_call.1} parent=1 // pred_region
      %s614 = ssub.s32 128, 128
      %615 = vsyncadd [#allocation4], %s614
      %s617 = sshll.u32 [#allocation7], 4
      %s618 = int_to_ptr.vmem [resolvable:$true] %s617
      %620 = dma.vmem_to_hbm [thread:$0]  %s618, 128, %s3, [#allocation4]
    $region25: #{tpu_custom_call.1} parent=1 // pred_fallthru
      _
    // Predicated region
    $region26: #{tpu_custom_call.1} parent=1 // pred_check
      _
    $region27: #{tpu_custom_call.1} parent=1 // pred_check_branch
      %622 = sbr.rel (0) target = $region29
    $region28: #{tpu_custom_call.1} parent=1 // pred_region
      %623 = dma.done [#allocation4], 128
    $region29: #{tpu_custom_call.1} parent=1 // pred_fallthru
      _
    %624 = vsyncpa [#allocation3], 1
    %625 = vsyncpa [#allocation6], 1
    %626 = vsyncpa [#allocation4], 1

</llo_original>
